<compile_context>
chip_gen: v6e
topology: v6e:2x2x1
jax: 0.10.0
libtpu: 0.0.40
codegen_flags: <defaults>
</compile_context>

<pallas_src>
import functools
import math

import jax
import jax.numpy as jnp
from jax.experimental import pallas as pl
from jax.experimental.pallas import tpu as pltpu

_NEG_INF = -1e30   # large finite negative (NaN-safe under exp / max)


# ---------------------------------------------------------------------------
# Kernel 1: fused per-group QKV projection (runs once over the sequence).
# grid = (batch, seq_tiles, head_groups)
# ---------------------------------------------------------------------------
def _qkv_proj_kernel(x_ref, wq_ref, bq_ref, wkv_ref, bkv_ref, q_ref, kv_ref):
    x = x_ref[0]                                              # (block_s, hidden)
    q = jnp.dot(x, wq_ref[0], preferred_element_type=jnp.float32) + bq_ref[0]
    kv = jnp.dot(x, wkv_ref[0], preferred_element_type=jnp.float32) + bkv_ref[0]
    q_ref[0] = q.astype(q_ref.dtype)
    kv_ref[0] = kv.astype(kv_ref.dtype)


# ---------------------------------------------------------------------------
# Kernel 2: flash-style attention + fused output projection.
# grid = (batch, q_tiles, head_groups, kv_tiles)   (kv innermost)
# ---------------------------------------------------------------------------
def _attn_kernel(q_ref, kv_ref, wo_ref, bo_ref, o_ref,
                 acc_ref, attn_ref, m_ref, l_ref, bias_ref=None, *,
                 mask, dim_head, heads_per_group, block_q, block_k,
                 compute_dtype, approx_recip):
    qi = pl.program_id(1)
    g = pl.program_id(2)
    ki = pl.program_id(3)
    n_groups = pl.num_programs(2)
    n_kv = pl.num_programs(3)

    dh = dim_head
    G = heads_per_group
    cd = compute_dtype

    # --- once per (batch, q-tile): zero Wo accumulator; build causal bias.
    @pl.when((g == 0) & (ki == 0))
    def _():
        acc_ref[...] = jnp.zeros_like(acc_ref)
        if mask:
            seq = bias_ref.shape[-1]
            rows = qi * block_q + jax.lax.broadcasted_iota(
                jnp.int32, (block_q, seq), 0)
            cols = jax.lax.broadcasted_iota(jnp.int32, (block_q, seq), 1)
            bias_ref[...] = jnp.where(rows >= cols, 0.0, _NEG_INF)

    # --- once per (batch, q-tile, group): reset online-softmax state.
    @pl.when(ki == 0)
    def _():
        m_ref[...] = jnp.full_like(m_ref, _NEG_INF)
        l_ref[...] = jnp.zeros_like(l_ref)
        attn_ref[...] = jnp.zeros_like(attn_ref)

    def _process_kv_tile():
        q_slab = q_ref[0]                                     # (block_q, G*dh)
        kv_slab = kv_ref[0]                                   # (block_k, 2*G*dh)
        if mask:
            col0 = pl.multiple_of(ki * block_k, block_k)
            bias = bias_ref[:, pl.ds(col0, block_k)]          # (block_q, block_k)
        # TODO(synk): when dim_head < 128 the per-head column slices below start
        # at non-128-lane offsets and may cost XLU relayouts; padding head slots
        # to 128 lanes would remove them at the cost of extra VMEM.
        for h in range(G):
            qh = q_slab[:, h * dh:(h + 1) * dh]
            kh = kv_slab[:, h * dh:(h + 1) * dh]
            vh = kv_slab[:, (G + h) * dh:(G + h + 1) * dh]
            # q @ k^T (softmax scale already folded into Wq / bq on the host).
            s = jax.lax.dot_general(
                qh, kh, dimension_numbers=(((1,), (1,)), ((), ())),
                preferred_element_type=jnp.float32)           # (block_q, block_k)
            if mask:
                s = s + bias
            m_prev = m_ref[:, h:h + 1]
            m_new = jnp.maximum(m_prev, jnp.max(s, axis=-1, keepdims=True))
            alpha = jnp.exp(m_prev - m_new)
            p = jnp.exp(s - m_new)
            l_ref[:, h:h + 1] = alpha * l_ref[:, h:h + 1] + jnp.sum(
                p, axis=-1, keepdims=True)
            attn_ref[:, h * dh:(h + 1) * dh] = (
                alpha * attn_ref[:, h * dh:(h + 1) * dh]
                + jnp.dot(p.astype(cd), vh,
                          preferred_element_type=jnp.float32))
            m_ref[:, h:h + 1] = m_new

    if mask:
        # Skip kv tiles that lie entirely above the causal frontier.
        pl.when(ki * block_k < (qi + 1) * block_q)(_process_kv_tile)
    else:
        _process_kv_tile()

    # --- last kv tile: normalize this group and fold into the Wo accumulator.
    @pl.when(ki == n_kv - 1)
    def _():
        for h in range(G):
            inv = pl.reciprocal(l_ref[:, h:h + 1], approx=approx_recip)
            attn_ref[:, h * dh:(h + 1) * dh] = (
                attn_ref[:, h * dh:(h + 1) * dh] * inv)
        acc_ref[...] += jnp.dot(attn_ref[...].astype(cd), wo_ref[0],
                                preferred_element_type=jnp.float32)

        @pl.when(g == n_groups - 1)
        def _():
            o_ref[0] = (acc_ref[...] + bo_ref[...]).astype(o_ref.dtype)


# ---------------------------------------------------------------------------
# Helpers / wrapper
# ---------------------------------------------------------------------------
def _pick_heads_per_group(num_head, dim_head, target_width):
    """Smallest divisor G of num_head with G*dim_head >= target_width
    (falls back to num_head if none reaches the target)."""
    for g in range(1, num_head + 1):
        if num_head % g == 0 and g * dim_head >= target_width:
            return g
    return num_head


def _tpu_defaults():
    """(is_v5e, vmem_limit_bytes) with safe fallbacks."""
    is_v5e = False
    try:
        kind = jax.devices()[0].device_kind.lower()
        is_v5e = ("v5 lite" in kind) or ("v5e" in kind) or ("v5litepod" in kind)
    except Exception:
        pass
    vmem_limit = 64 * 1024 * 1024
    try:
        cap = int(pltpu.get_tpu_info().vmem_capacity_bytes)
        # ~80% of physical per-core VMEM: ~102 MiB on v5e/v6e, ~51 MiB on v7x.
        vmem_limit = max(32 * 1024 * 1024, int(cap * 0.8))
    except Exception:
        pass
    return is_v5e, vmem_limit


def attentions_forward(x, params, *, num_head, mask,
                       heads_per_group=None, block_q=None, block_k=None,
                       compute_dtype=jnp.bfloat16):
    """x: (B, S, hidden) -> (B, S, hidden). Matches `Attentions.forward`."""
    B, S, hidden = x.shape
    assert hidden % num_head == 0, "hidden_size must be divisible by num_head"
    dh = hidden // num_head
    wq, bq, wk, bk, wv, bv, wo, bo = params

    is_v5e, vmem_limit = _tpu_defaults()

    # Head grouping: aim for a 256-wide (128 on v5e) concat / Wo contraction.
    if heads_per_group is None:
        heads_per_group = _pick_heads_per_group(num_head, dh,
                                                128 if is_v5e else 256)
    G = heads_per_group
    assert num_head % G == 0, "heads_per_group must divide num_head"
    if (G * dh) % 128 != 0 and (G * dh) != hidden:
        G = num_head          # single group: slab widths equal full array dims
    num_groups = num_head // G

    # Per-generation tile defaults (MXU is 128-wide on v5e, 256 on v6e/v7x).
    if block_q is None:
        block_q = 128 if is_v5e else 256
    block_q = min(block_q, S)
    if block_k is None:
        block_k = 128
    block_k = min(block_k, S)
    assert S % block_q == 0, f"S={S} must be a multiple of block_q={block_q}"
    assert S % block_k == 0, f"S={S} must be a multiple of block_k={block_k}"
    num_q_tiles = S // block_q
    num_kv_tiles = S // block_k

    cd = compute_dtype
    f32 = jnp.float32
    cd_bytes = jnp.dtype(cd).itemsize
    # NOTE: approximate reciprocal => softmax rows don't sum to exactly 1
    # (~1e-3 relative); only used on the bf16 fast path.
    approx_recip = jnp.dtype(cd) != jnp.dtype(jnp.float32)

    # --- host-side one-time repack of per-head weights into per-group slabs.
    scale = 1.0 / math.sqrt(dh)                     # folded into Wq / bq

    def group_pack(w):   # (num_head, hidden, dh) -> (num_groups, hidden, G*dh)
        return (w.reshape(num_groups, G, hidden, dh)
                 .transpose(0, 2, 1, 3)
                 .reshape(num_groups, hidden, G * dh))

    wq_g = group_pack(wq * scale).astype(cd)
    bq_g = (bq * scale).reshape(num_groups, 1, G * dh).astype(f32)
    # kv slab per group: [K_h0 .. K_h{G-1} | V_h0 .. V_h{G-1}]
    wkv_g = jnp.concatenate([group_pack(wk), group_pack(wv)], axis=-1).astype(cd)
    bkv_g = jnp.concatenate([bk.reshape(num_groups, 1, G * dh),
                             bv.reshape(num_groups, 1, G * dh)],
                            axis=-1).astype(f32)
    wo_g = wo.reshape(num_groups, G * dh, hidden).astype(cd)
    bo_p = bo.reshape(1, hidden).astype(f32)

    x_c = x.astype(cd)

    # ---------------- phase 1: QKV projection (once over the sequence) -----
    block_s = block_q
    proj_cost = pl.CostEstimate(
        flops=int(6 * B * S * hidden * hidden),
        transcendentals=0,
        bytes_accessed=int(4 * B * S * hidden * cd_bytes
                           + 3 * hidden * hidden * cd_bytes))

    q_proj, kv_proj = pl.pallas_call(
        _qkv_proj_kernel,
        out_shape=(jax.ShapeDtypeStruct((B, S, hidden), cd),
                   jax.ShapeDtypeStruct((B, S, 2 * hidden), cd)),
        grid_spec=pltpu.PrefetchScalarGridSpec(
            num_scalar_prefetch=0,
            grid=(B, S // block_s, num_groups),
            in_specs=[
                pl.BlockSpec((1, block_s, hidden), lambda b, s, g: (b, s, 0)),
                pl.BlockSpec((1, hidden, G * dh), lambda b, s, g: (g, 0, 0)),
                pl.BlockSpec((1, 1, G * dh), lambda b, s, g: (g, 0, 0)),
                pl.BlockSpec((1, hidden, 2 * G * dh), lambda b, s, g: (g, 0, 0)),
                pl.BlockSpec((1, 1, 2 * G * dh), lambda b, s, g: (g, 0, 0)),
            ],
            out_specs=(
                pl.BlockSpec((1, block_s, G * dh), lambda b, s, g: (b, s, g)),
                pl.BlockSpec((1, block_s, 2 * G * dh), lambda b, s, g: (b, s, g)),
            ),
        ),
        compiler_params=pltpu.CompilerParams(
            dimension_semantics=("parallel", "parallel", "arbitrary"),
            vmem_limit_bytes=vmem_limit),
        cost_estimate=proj_cost,
    )(x_c, wq_g, bq_g, wkv_g, bkv_g)

    # ---------------- phase 2: flash attention + output projection ---------
    kernel = functools.partial(
        _attn_kernel, mask=mask, dim_head=dh, heads_per_group=G,
        block_q=block_q, block_k=block_k, compute_dtype=cd,
        approx_recip=approx_recip)

    scratch = [
        pltpu.VMEM((block_q, hidden), f32),        # Wo accumulator
        pltpu.VMEM((block_q, G * dh), f32),        # un-normalized attention acc
        pltpu.VMEM((block_q, G), f32),             # running max (per head)
        pltpu.VMEM((block_q, G), f32),             # running sum (per head)
    ]
    if mask:
        scratch.append(pltpu.VMEM((block_q, S), f32))   # additive causal bias

    attn_cost = pl.CostEstimate(
        flops=int(4 * B * S * S * hidden + 2 * B * S * hidden * hidden),
        transcendentals=int(B * num_head * S * S),
        bytes_accessed=int(B * S * hidden * cd_bytes
                           + 2 * B * S * hidden * cd_bytes * num_q_tiles
                           + B * num_q_tiles * hidden * hidden * cd_bytes
                           + B * S * hidden * x.dtype.itemsize))

    return pl.pallas_call(
        kernel,
        out_shape=jax.ShapeDtypeStruct((B, S, hidden), x.dtype),
        grid_spec=pltpu.PrefetchScalarGridSpec(
            num_scalar_prefetch=0,
            grid=(B, num_q_tiles, num_groups, num_kv_tiles),
            in_specs=[
                pl.BlockSpec((1, block_q, G * dh), lambda b, q, g, k: (b, q, g)),
                pl.BlockSpec((1, block_k, 2 * G * dh), lambda b, q, g, k: (b, k, g)),
                pl.BlockSpec((1, G * dh, hidden), lambda b, q, g, k: (g, 0, 0)),
                pl.BlockSpec((1, hidden), lambda b, q, g, k: (0, 0)),
            ],
            out_specs=pl.BlockSpec((1, block_q, hidden),
                                   lambda b, q, g, k: (b, q, 0)),
            scratch_shapes=scratch,
        ),
        compiler_params=pltpu.CompilerParams(
            dimension_semantics=("parallel", "parallel", "arbitrary", "arbitrary"),
            vmem_limit_bytes=vmem_limit),
        cost_estimate=attn_cost,
    )(q_proj, kv_proj, wo_g, bo_p)


# ---------------------------------------------------------------------------
# Pure-JAX reference mirroring the PyTorch forward, and parameter init.
# ---------------------------------------------------------------------------
def reference_forward(x, params, *, num_head, mask):
    wq, bq, wk, bk, wv, bv, wo, bo = params
    B, S, hidden = x.shape
    dh = hidden // num_head
    outs = []
    for h in range(num_head):
        q = x @ wq[h] + bq[h, 0]
        k = x @ wk[h] + bk[h, 0]
        v = x @ wv[h] + bv[h, 0]
        s = jnp.einsum("bqd,bkd->bqk", q, k) / jnp.sqrt(jnp.float32(dh))
        if mask:
            m = jnp.tril(jnp.ones((S, S), jnp.float32))[None]
            s = jnp.where(m == 0, -jnp.inf, s)
        p = jax.nn.softmax(s, axis=-1)
        outs.append(jnp.einsum("bqk,bkd->bqd", p, v))
    cat = jnp.concatenate(outs, axis=-1)
    return cat @ wo + bo[0]


def init_params(key, hidden, num_head, dtype=jnp.float32):
    dh = hidden // num_head
    ks = jax.random.split(key, 8)
    scale = 0.1
    wq = scale * jax.random.normal(ks[0], (num_head, hidden, dh), dtype)
    bq = scale * jax.random.normal(ks[1], (num_head, 1, dh), dtype)
    wk = scale * jax.random.normal(ks[2], (num_head, hidden, dh), dtype)
    bk = scale * jax.random.normal(ks[3], (num_head, 1, dh), dtype)
    wv = scale * jax.random.normal(ks[4], (num_head, hidden, dh), dtype)
    bv = scale * jax.random.normal(ks[5], (num_head, 1, dh), dtype)
    wo = scale * jax.random.normal(ks[6], (hidden, hidden), dtype)
    bo = scale * jax.random.normal(ks[7], (1, hidden), dtype)
    return (wq, bq, wk, bk, wv, bv, wo, bo)


if __name__ == "__main__":
    # --- small shapes consistent with the module --------------------------
    B, S, hidden, num_head = 2, 8, 32, 4
    key = jax.random.PRNGKey(0)
    kx, kp = jax.random.split(key)
    x = jax.random.normal(kx, (B, S, hidden), jnp.float32)
    params = init_params(kp, hidden, num_head)

    for m in (True, False):
        ref = reference_forward(x, params, num_head=num_head, mask=m)

        out = attentions_forward(x, params, num_head=num_head, mask=m,
                                 compute_dtype=jnp.bfloat16)
        out = jax.block_until_ready(out)
        assert out.shape == (B, S, hidden)
        err = float(jnp.max(jnp.abs(out - ref)))
        assert err < 5e-2, f"bf16 mask={m} max err {err}"

        out32 = attentions_forward(x, params, num_head=num_head, mask=m,
                                   compute_dtype=jnp.float32)
        out32 = jax.block_until_ready(out32)
        err32 = float(jnp.max(jnp.abs(out32 - ref)))
        assert err32 < 1e-2, f"f32 mask={m} max err {err32}"

    # --- tiling-exercising shape: multiple q/kv tiles, >1 head group -------
    B2, S2, hidden2, num_head2 = 1, 512, 512, 8
    kx2, kp2 = jax.random.split(jax.random.PRNGKey(1))
    x2 = jax.random.normal(kx2, (B2, S2, hidden2), jnp.float32)
    params2 = init_params(kp2, hidden2, num_head2)
    ref2 = reference_forward(x2, params2, num_head=num_head2, mask=True)
    out2 = attentions_forward(x2, params2, num_head=num_head2, mask=True,
                              compute_dtype=jnp.float32)
    out2 = jax.block_until_ready(out2)
    err2 = float(jnp.max(jnp.abs(out2 - ref2)))
    assert out2.shape == (B2, S2, hidden2)
    assert err2 < 2e-2, f"moderate f32 max err {err2}"

    print("KERNEL_OK")
</pallas_src>

<mosaic_0001>
module attributes {stable_mosaic.version = 11 : i64} {
  func.func @_qkv_proj_kernel(%arg0: i32, %arg1: i32, %arg2: i32, %arg3: memref<1x8x32xbf16, #tpu.memory_space<vmem>>, %arg4: memref<1x32x32xbf16, #tpu.memory_space<vmem>>, %arg5: memref<1x1x32xf32, #tpu.memory_space<vmem>>, %arg6: memref<1x32x64xbf16, #tpu.memory_space<vmem>>, %arg7: memref<1x1x64xf32, #tpu.memory_space<vmem>>, %arg8: memref<1x8x32xbf16, #tpu.memory_space<vmem>>, %arg9: memref<1x8x64xbf16, #tpu.memory_space<vmem>>) attributes {dimension_semantics = [#tpu.dimension_semantics<parallel>, #tpu.dimension_semantics<parallel>, #tpu.dimension_semantics<arbitrary>], iteration_bounds = array<i64: 2, 1, 1>, scalar_prefetch = 0 : i64, scratch_operands = 0 : i64, tpu.core_type = #tpu.core_type<tc>, window_params = [{transform_indices = @transform_0, window_bounds = array<i64: 1, 8, 32>}, {transform_indices = @transform_1, window_bounds = array<i64: 1, 32, 32>}, {transform_indices = @transform_2, window_bounds = array<i64: 1, 1, 32>}, {transform_indices = @transform_3, window_bounds = array<i64: 1, 32, 64>}, {transform_indices = @transform_4, window_bounds = array<i64: 1, 1, 64>}, {transform_indices = @transform_5, window_bounds = array<i64: 1, 8, 32>}, {transform_indices = @transform_6, window_bounds = array<i64: 1, 8, 64>}]} {
    %c0 = arith.constant 0 : index
    %c0_0 = arith.constant 0 : index
    %c0_1 = arith.constant 0 : index
    %0 = vector.load %arg3[%c0, %c0_0, %c0_1] : memref<1x8x32xbf16, #tpu.memory_space<vmem>>, vector<1x8x32xbf16>
    %1 = vector.shape_cast %0 : vector<1x8x32xbf16> to vector<8x32xbf16>
    %c0_2 = arith.constant 0 : index
    %c0_3 = arith.constant 0 : index
    %c0_4 = arith.constant 0 : index
    %2 = vector.load %arg4[%c0_2, %c0_3, %c0_4] : memref<1x32x32xbf16, #tpu.memory_space<vmem>>, vector<1x32x32xbf16>
    %3 = vector.shape_cast %2 : vector<1x32x32xbf16> to vector<32x32xbf16>
    %cst = arith.constant dense<0.000000e+00> : vector<8x32xf32>
    %4 = tpu.matmul %1, %3, %cst {dimension_numbers = #tpu.dot_dimension_numbers<[1], [0], [0], [1], [0, 0, 1, 1], [], []>} : vector<8x32xbf16>, vector<32x32xbf16>, vector<8x32xf32> -> vector<8x32xf32>
    %c0_5 = arith.constant 0 : index
    %c0_6 = arith.constant 0 : index
    %c0_7 = arith.constant 0 : index
    %5 = vector.load %arg5[%c0_5, %c0_6, %c0_7] : memref<1x1x32xf32, #tpu.memory_space<vmem>>, vector<1x1x32xf32>
    %6 = vector.shape_cast %5 : vector<1x1x32xf32> to vector<1x32xf32>
    %7 = vector.broadcast %6 : vector<1x32xf32> to vector<8x32xf32>
    %8 = arith.addf %4, %7 : vector<8x32xf32>
    %c0_8 = arith.constant 0 : index
    %c0_9 = arith.constant 0 : index
    %c0_10 = arith.constant 0 : index
    %9 = vector.load %arg6[%c0_8, %c0_9, %c0_10] : memref<1x32x64xbf16, #tpu.memory_space<vmem>>, vector<1x32x64xbf16>
    %10 = vector.shape_cast %9 : vector<1x32x64xbf16> to vector<32x64xbf16>
    %cst_11 = arith.constant dense<0.000000e+00> : vector<8x64xf32>
    %11 = tpu.matmul %1, %10, %cst_11 {dimension_numbers = #tpu.dot_dimension_numbers<[1], [0], [0], [1], [0, 0, 1, 1], [], []>} : vector<8x32xbf16>, vector<32x64xbf16>, vector<8x64xf32> -> vector<8x64xf32>
    %c0_12 = arith.constant 0 : index
    %c0_13 = arith.constant 0 : index
    %c0_14 = arith.constant 0 : index
    %12 = vector.load %arg7[%c0_12, %c0_13, %c0_14] : memref<1x1x64xf32, #tpu.memory_space<vmem>>, vector<1x1x64xf32>
    %13 = vector.shape_cast %12 : vector<1x1x64xf32> to vector<1x64xf32>
    %14 = vector.broadcast %13 : vector<1x64xf32> to vector<8x64xf32>
    %15 = arith.addf %11, %14 : vector<8x64xf32>
    %16 = arith.truncf %8 : vector<8x32xf32> to vector<8x32xbf16>
    %c0_15 = arith.constant 0 : index
    %c0_16 = arith.constant 0 : index
    %c0_17 = arith.constant 0 : index
    %17 = vector.load %arg8[%c0_15, %c0_16, %c0_17] : memref<1x8x32xbf16, #tpu.memory_space<vmem>>, vector<1x8x32xbf16>
    %18 = vector.shape_cast %17 : vector<1x8x32xbf16> to vector<8x32xbf16>
    %19 = vector.shape_cast %16 : vector<8x32xbf16> to vector<1x8x32xbf16>
    tpu.vector_store %arg8[%c0_15, %c0_16, %c0_17], %19 {strides = array<i32>} : memref<1x8x32xbf16, #tpu.memory_space<vmem>>, vector<1x8x32xbf16>,
    %20 = arith.truncf %15 : vector<8x64xf32> to vector<8x64xbf16>
    %c0_18 = arith.constant 0 : index
    %c0_19 = arith.constant 0 : index
    %c0_20 = arith.constant 0 : index
    %21 = vector.load %arg9[%c0_18, %c0_19, %c0_20] : memref<1x8x64xbf16, #tpu.memory_space<vmem>>, vector<1x8x64xbf16>
    %22 = vector.shape_cast %21 : vector<1x8x64xbf16> to vector<8x64xbf16>
    %23 = vector.shape_cast %20 : vector<8x64xbf16> to vector<1x8x64xbf16>
    tpu.vector_store %arg9[%c0_18, %c0_19, %c0_20], %23 {strides = array<i32>} : memref<1x8x64xbf16, #tpu.memory_space<vmem>>, vector<1x8x64xbf16>,
    return
  }
  func.func @transform_0(%arg0: i32, %arg1: i32, %arg2: i32) -> (i32, i32, i32) {
    %c0_i32 = arith.constant 0 : i32
    %c0_i32_0 = arith.constant 0 : i32
    return %arg0, %arg1, %c0_i32 : i32, i32, i32
  }
  func.func @transform_1(%arg0: i32, %arg1: i32, %arg2: i32) -> (i32, i32, i32) {
    %c0_i32 = arith.constant 0 : i32
    %c0_i32_0 = arith.constant 0 : i32
    %c0_i32_1 = arith.constant 0 : i32
    return %arg2, %c0_i32, %c0_i32_0 : i32, i32, i32
  }
  func.func @transform_2(%arg0: i32, %arg1: i32, %arg2: i32) -> (i32, i32, i32) {
    %c0_i32 = arith.constant 0 : i32
    %c0_i32_0 = arith.constant 0 : i32
    %c0_i32_1 = arith.constant 0 : i32
    return %arg2, %c0_i32, %c0_i32_0 : i32, i32, i32
  }
  func.func @transform_3(%arg0: i32, %arg1: i32, %arg2: i32) -> (i32, i32, i32) {
    %c0_i32 = arith.constant 0 : i32
    %c0_i32_0 = arith.constant 0 : i32
    %c0_i32_1 = arith.constant 0 : i32
    return %arg2, %c0_i32, %c0_i32_0 : i32, i32, i32
  }
  func.func @transform_4(%arg0: i32, %arg1: i32, %arg2: i32) -> (i32, i32, i32) {
    %c0_i32 = arith.constant 0 : i32
    %c0_i32_0 = arith.constant 0 : i32
    %c0_i32_1 = arith.constant 0 : i32
    return %arg2, %c0_i32, %c0_i32_0 : i32, i32, i32
  }
  func.func @transform_5(%arg0: i32, %arg1: i32, %arg2: i32) -> (i32, i32, i32) {
    %c0_i32 = arith.constant 0 : i32
    return %arg0, %arg1, %arg2 : i32, i32, i32
  }
  func.func @transform_6(%arg0: i32, %arg1: i32, %arg2: i32) -> (i32, i32, i32) {
    %c0_i32 = arith.constant 0 : i32
    return %arg0, %arg1, %arg2 : i32, i32, i32
  }
}

</mosaic_0001>

<llo_original>
// kernel: tpu_custom_call.1
$region0: #{tpu_custom_call.1}
  #allocation0 [shape = 'u32[]', space=smem, size = 0x4, offset = 0x4, fixed_abs, tag = 'smem constant byte address 0x4 - core index']
  #allocation1 [shape = 'u32[144,128]{1,0:T(1,128)}', space=vmem, size = 0x12000, scoped, tag = 'internal scratch']
  %s0 = inlined_call_operand.hbm [shape: bf16[2,8,32], index: 0, kind: input, shape index: {}]
  %s1 = inlined_call_operand.hbm [shape: bf16[1,32,32], index: 1, kind: input, shape index: {}]
  %s2 = inlined_call_operand.vmem [shape: f32[1,1,32], index: 2, kind: input, shape index: {}]
  %s3 = inlined_call_operand.hbm [shape: bf16[1,32,64], index: 3, kind: input, shape index: {}]
  %s4 = inlined_call_operand.vmem [shape: f32[1,1,64], index: 4, kind: input, shape index: {}]
  %s5 = inlined_call_operand.hbm [shape: bf16[2,8,32], index: 5, kind: output, shape index: {0}]
  %s6 = inlined_call_operand.hbm [shape: bf16[2,8,64], index: 6, kind: output, shape index: {1}]
  %7 = xla_tuple %s5, %s6
  %s8 = sld [smem:[#allocation0]]
  $region73: #{tpu_custom_call.1} parent=0
    _
  %s10 = ssub.s32 1, %s8
  %s11 = scalar_select 0, %s10, %s8
  $region1: #{tpu_custom_call.1} parent=0
    #allocation2 [shape = 'u8[4096]{0}', space=vmem, size = 0x1000, scoped, tag = 'input window, operand 0']
    #allocation3 [shape = 's32[2]{0}', space=sflag, size = 0x8, scoped, tag = 'scoped memory for tpu_custom_call.1']
    #allocation4 [shape = 's32[2]{0}', space=sflag, size = 0x8, scoped, tag = 'scoped memory for tpu_custom_call.1']
    #allocation5 [shape = 'u8[8192]{0}', space=vmem, size = 0x2000, scoped, tag = 'input window, operand 1, single buffered']
    #allocation6 [shape = 's32[1]{0}', space=sflag, size = 0x4, scoped, tag = 'scoped memory for tpu_custom_call.1']
    #allocation7 [shape = 'u8[8192]{0}', space=vmem, size = 0x2000, scoped, tag = 'input window, operand 3, single buffered']
    #allocation8 [shape = 'u8[4096]{0}', space=vmem, size = 0x1000, scoped, tag = 'output window, operand 0']
    #allocation9 [shape = 'u8[4096]{0}', space=vmem, size = 0x1000, scoped, tag = 'output window, operand 1']
    #allocation10 [shape = 's32[2]{0}', space=sflag, size = 0x8, scoped, tag = 'scoped memory for tpu_custom_call.1']
    %12 = vsyncpa [#allocation3], 0
    %s13 = scalar_lea.sflag [#allocation3], 1
    %14 = vsyncpa %s13, 0
    %15 = vsyncpa [#allocation6], 0
    %16 = vsyncpa [#allocation4], 0
    %s17 = scalar_lea.sflag [#allocation4], 1
    %18 = vsyncpa %s17, 0
    %19 = vsyncpa [#allocation10], 0
    %s20 = scalar_lea.sflag [#allocation10], 1
    %21 = vsyncpa %s20, 0
    loop: start=0, step=1, limit=4
    $region2: #{tpu_custom_call.1} parent=1 // loop_pre_header
      _
    $region3: #{tpu_custom_call.1} parent=1 // loop_header
      %s23 = sphi 0, %s27
      %p24 = scmp.ge.s32.totalorder %s23, 4
      %s30 = sphi 0, %s49
      %s31 = sphi 0, %s45
      %s32 = sphi 0, %s41
      %s33 = sphi 0, %s30
      %s34 = sphi 0, %s31
      %s35 = sphi 0, %s32
      %s36 = sphi 0, %s33
      %s37 = sphi 0, %s34
      %s38 = sphi 0, %s35
      %s54 = sphi 0, %s56
      %s57 = sphi 0, %s54
      %s58 = sphi 0, %s57
      %s74 = sphi 0, %s58
      %s80 = sphi 0, %s82
      %s83 = sphi 0, %s80
      %s84 = sphi 0, %s83
      %s100 = sphi 0, %s84
      %s106 = sphi 0, %s108
      %s109 = sphi 0, %s106
      %s110 = sphi 0, %s109
      %s126 = sphi 0, %s110
      %s132 = sphi 0, %s134
      %s135 = sphi 0, %s132
      %s136 = sphi 0, %s135
      %s152 = sphi 0, %s136
      %s158 = sphi 0, %s160
      %s161 = sphi 0, %s158
      %s162 = sphi 0, %s161
      %s178 = sphi 0, %s162
      %s188 = sphi 0, %s190
      %s191 = sphi 0, %s188
      %s192 = sphi 0, %s191
      %s208 = sphi 0, %s192
      %s218 = sphi 0, %s220
      %s221 = sphi 0, %s218
      %s222 = sphi 0, %s221
      %s238 = sphi 0, %s222
    $region4: #{tpu_custom_call.1} parent=1 // loop_header_branch
      %26 = sbr.rel (%p24) target = $region8
    $region5: #{tpu_custom_call.1} parent=1 // loop_body
      %s28 = ssub.s32 %s23, 1
      %s29 = ssub.s32 %s23, 2
      %s39 = sadd.s32 1, %s32
      %p40 = scmp.ge.s32.totalorder %s39, 1
      %s41 = scalar_select %p40, 0, %s39
      %s42 = sadd.s32 1, %s31
      %s43 = scalar_select %p40, %s42, %s31
      %p44 = scmp.ge.s32.totalorder %s43, 1
      %s45 = scalar_select %p44, 0, %s43
      %s46 = sadd.s32 1, %s30
      %s47 = scalar_select %p44, %s46, %s30
      %p48 = scmp.ge.s32.totalorder %s47, 2
      %s49 = scalar_select %p48, 0, %s47
      %s50 = ssub.s32 %s30, %s49
      %s51 = ssub.s32 %s31, %s45
      %s52 = sor.u32 %s50, %s51
      %p53 = scmp.eq.s32.totalorder %s52, 0
      %s55 = sadd.s32 %s54, 1
      %s56 = scalar_select %p53, %s54, %s55
      %p59 = pneg %p53
      %p60 = scmp.eq.s32.totalorder %s23, 1
      %p61 = por %p59, %p60
      %p62 = scmp.ne.s32.totalorder %s54, %s57
      %p63 = scmp.eq.s32.totalorder %s23, 0
      %p64 = por %p62, %p63
      %p65 = scmp.ne.s32.totalorder %s54, %s57
      %p66 = scmp.eq.s32.totalorder %s28, 1
      %p67 = por %p65, %p66
      %p68 = scmp.ne.s32.totalorder %s57, %s58
      %p69 = scmp.eq.s32.totalorder %s28, 0
      %p70 = por %p68, %p69
      %p71 = scmp.ne.s32.totalorder %s57, %s58
      %p72 = scmp.eq.s32.totalorder %s29, 1
      %p73 = por %p71, %p72
      %p75 = scmp.ne.s32.totalorder %s58, %s74
      %p76 = scmp.eq.s32.totalorder %s29, 0
      %p77 = por %p75, %p76
      %s78 = ssub.s32 %s32, %s41
      %p79 = scmp.eq.s32.totalorder %s78, 0
      %s81 = sadd.s32 %s80, 1
      %s82 = scalar_select %p79, %s80, %s81
      %p85 = pneg %p79
      %p86 = scmp.eq.s32.totalorder %s23, 1
      %p87 = por %p85, %p86
      %p88 = scmp.ne.s32.totalorder %s80, %s83
      %p89 = scmp.eq.s32.totalorder %s23, 0
      %p90 = por %p88, %p89
      %p91 = scmp.ne.s32.totalorder %s80, %s83
      %p92 = scmp.eq.s32.totalorder %s28, 1
      %p93 = por %p91, %p92
      %p94 = scmp.ne.s32.totalorder %s83, %s84
      %p95 = scmp.eq.s32.totalorder %s28, 0
      %p96 = por %p94, %p95
      %p97 = scmp.ne.s32.totalorder %s83, %s84
      %p98 = scmp.eq.s32.totalorder %s29, 1
      %p99 = por %p97, %p98
      %p101 = scmp.ne.s32.totalorder %s84, %s100
      %p102 = scmp.eq.s32.totalorder %s29, 0
      %p103 = por %p101, %p102
      %s104 = ssub.s32 %s32, %s41
      %p105 = scmp.eq.s32.totalorder %s104, 0
      %s107 = sadd.s32 %s106, 1
      %s108 = scalar_select %p105, %s106, %s107
      %p111 = pneg %p105
      %p112 = scmp.eq.s32.totalorder %s23, 1
      %p113 = por %p111, %p112
      %p114 = scmp.ne.s32.totalorder %s106, %s109
      %p115 = scmp.eq.s32.totalorder %s23, 0
      %p116 = por %p114, %p115
      %p117 = scmp.ne.s32.totalorder %s106, %s109
      %p118 = scmp.eq.s32.totalorder %s28, 1
      %p119 = por %p117, %p118
      %p120 = scmp.ne.s32.totalorder %s109, %s110
      %p121 = scmp.eq.s32.totalorder %s28, 0
      %p122 = por %p120, %p121
      %p123 = scmp.ne.s32.totalorder %s109, %s110
      %p124 = scmp.eq.s32.totalorder %s29, 1
      %p125 = por %p123, %p124
      %p127 = scmp.ne.s32.totalorder %s110, %s126
      %p128 = scmp.eq.s32.totalorder %s29, 0
      %p129 = por %p127, %p128
      %s130 = ssub.s32 %s32, %s41
      %p131 = scmp.eq.s32.totalorder %s130, 0
      %s133 = sadd.s32 %s132, 1
      %s134 = scalar_select %p131, %s132, %s133
      %p137 = pneg %p131
      %p138 = scmp.eq.s32.totalorder %s23, 1
      %p139 = por %p137, %p138
      %p140 = scmp.ne.s32.totalorder %s132, %s135
      %p141 = scmp.eq.s32.totalorder %s23, 0
      %p142 = por %p140, %p141
      %p143 = scmp.ne.s32.totalorder %s132, %s135
      %p144 = scmp.eq.s32.totalorder %s28, 1
      %p145 = por %p143, %p144
      %p146 = scmp.ne.s32.totalorder %s135, %s136
      %p147 = scmp.eq.s32.totalorder %s28, 0
      %p148 = por %p146, %p147
      %p149 = scmp.ne.s32.totalorder %s135, %s136
      %p150 = scmp.eq.s32.totalorder %s29, 1
      %p151 = por %p149, %p150
      %p153 = scmp.ne.s32.totalorder %s136, %s152
      %p154 = scmp.eq.s32.totalorder %s29, 0
      %p155 = por %p153, %p154
      %s156 = ssub.s32 %s32, %s41
      %p157 = scmp.eq.s32.totalorder %s156, 0
      %s159 = sadd.s32 %s158, 1
      %s160 = scalar_select %p157, %s158, %s159
      %p163 = pneg %p157
      %p164 = scmp.eq.s32.totalorder %s23, 1
      %p165 = por %p163, %p164
      %p166 = scmp.ne.s32.totalorder %s158, %s161
      %p167 = scmp.eq.s32.totalorder %s23, 0
      %p168 = por %p166, %p167
      %p169 = scmp.ne.s32.totalorder %s158, %s161
      %p170 = scmp.eq.s32.totalorder %s28, 1
      %p171 = por %p169, %p170
      %p172 = scmp.ne.s32.totalorder %s161, %s162
      %p173 = scmp.eq.s32.totalorder %s28, 0
      %p174 = por %p172, %p173
      %p175 = scmp.ne.s32.totalorder %s161, %s162
      %p176 = scmp.eq.s32.totalorder %s29, 1
      %p177 = por %p175, %p176
      %p179 = scmp.ne.s32.totalorder %s162, %s178
      %p180 = scmp.eq.s32.totalorder %s29, 0
      %p181 = por %p179, %p180
      %s182 = ssub.s32 %s30, %s49
      %s183 = ssub.s32 %s31, %s45
      %s184 = sor.u32 %s182, %s183
      %s185 = ssub.s32 %s32, %s41
      %s186 = sor.u32 %s184, %s185
      %p187 = scmp.eq.s32.totalorder %s186, 0
      %s189 = sadd.s32 %s188, 1
      %s190 = scalar_select %p187, %s188, %s189
      %p193 = pneg %p187
      %p194 = scmp.eq.s32.totalorder %s23, 1
      %p195 = por %p193, %p194
      %p196 = scmp.ne.s32.totalorder %s188, %s191
      %p197 = scmp.eq.s32.totalorder %s23, 0
      %p198 = por %p196, %p197
      %p199 = scmp.ne.s32.totalorder %s188, %s191
      %p200 = scmp.eq.s32.totalorder %s28, 1
      %p201 = por %p199, %p200
      %p202 = scmp.ne.s32.totalorder %s191, %s192
      %p203 = scmp.eq.s32.totalorder %s28, 0
      %p204 = por %p202, %p203
      %p205 = scmp.ne.s32.totalorder %s191, %s192
      %p206 = scmp.eq.s32.totalorder %s29, 1
      %p207 = por %p205, %p206
      %p209 = scmp.ne.s32.totalorder %s192, %s208
      %p210 = scmp.eq.s32.totalorder %s29, 0
      %p211 = por %p209, %p210
      %s212 = ssub.s32 %s30, %s49
      %s213 = ssub.s32 %s31, %s45
      %s214 = sor.u32 %s212, %s213
      %s215 = ssub.s32 %s32, %s41
      %s216 = sor.u32 %s214, %s215
      %p217 = scmp.eq.s32.totalorder %s216, 0
      %s219 = sadd.s32 %s218, 1
      %s220 = scalar_select %p217, %s218, %s219
      %p223 = pneg %p217
      %p224 = scmp.eq.s32.totalorder %s23, 1
      %p225 = por %p223, %p224
      %p226 = scmp.ne.s32.totalorder %s218, %s221
      %p227 = scmp.eq.s32.totalorder %s23, 0
      %p228 = por %p226, %p227
      %p229 = scmp.ne.s32.totalorder %s218, %s221
      %p230 = scmp.eq.s32.totalorder %s28, 1
      %p231 = por %p229, %p230
      %p232 = scmp.ne.s32.totalorder %s221, %s222
      %p233 = scmp.eq.s32.totalorder %s28, 0
      %p234 = por %p232, %p233
      %p235 = scmp.ne.s32.totalorder %s221, %s222
      %p236 = scmp.eq.s32.totalorder %s29, 1
      %p237 = por %p235, %p236
      %p239 = scmp.ne.s32.totalorder %s222, %s238
      %p240 = scmp.eq.s32.totalorder %s29, 0
      %p241 = por %p239, %p240
      %p242 = scmp.le.s32.totalorder 1, %s23
      %p243 = scmp.lt.s32.totalorder %s23, 3
      %p244 = pnand %p242, %p243
      %p245 = pneg %p244
      // Predicated region
      $region9: #{tpu_custom_call.1} parent=5 // pred_check
        _
      $region10: #{tpu_custom_call.1} parent=5 // pred_check_branch
        %247 = sbr.rel (%p244) target = $region12
      $region11: #{tpu_custom_call.1} parent=5 // pred_region
        %s248 = ssub.s32 %s23, 1
        // Predicated region
        $region13: #{tpu_custom_call.1} parent=11 // pred_check
          %p249 = pneg %p96
        $region14: #{tpu_custom_call.1} parent=11 // pred_check_branch
          %251 = sbr.rel (%p249) target = $region16
        $region15: #{tpu_custom_call.1} parent=11 // pred_region
          %s253 = ssub.s32 256, 256
          %254 = vsyncadd [#allocation6], %s253
          %s255 = smul.addr %s35, 4
          %s256 = smul.addr %s255, 64
          %s257 = scalar_lea.hbm %s1, %s256
          %s258 = sshll.u32 [#allocation5], 4
          %s259 = int_to_ptr.vmem [resolvable:$true] %s258
          %264 = dma.hbm_to_vmem [thread:$0]  %s257, 256, %s259, [#allocation6], 64, 64, 4
        $region16: #{tpu_custom_call.1} parent=11 // pred_fallthru
          _
        // Predicated region
        $region17: #{tpu_custom_call.1} parent=11 // pred_check
          %p265 = pneg %p122
        $region18: #{tpu_custom_call.1} parent=11 // pred_check_branch
          %267 = sbr.rel (%p265) target = $region20
        $region19: #{tpu_custom_call.1} parent=11 // pred_region
          %p268 = scmp.lt.s32.totalorder %s35, 0
          %s269 = scalar_select %p268, %s35, 0
          %s270 = scalar_lea.vmem %s2, %s269
        $region20: #{tpu_custom_call.1} parent=11 // pred_fallthru
          _
        // Predicated region
        $region21: #{tpu_custom_call.1} parent=11 // pred_check
          %p271 = pneg %p148
        $region22: #{tpu_custom_call.1} parent=11 // pred_check_branch
          %273 = sbr.rel (%p271) target = $region24
        $region23: #{tpu_custom_call.1} parent=11 // pred_region
          %s275 = ssub.s32 256, 256
          %276 = vsyncadd [#allocation6], %s275
          %s277 = smul.addr %s35, 4
          %s278 = smul.addr %s277, 64
          %s279 = scalar_lea.hbm %s3, %s278
          %s280 = sshll.u32 [#allocation7], 4
          %s281 = int_to_ptr.vmem [resolvable:$true] %s280
          %286 = dma.hbm_to_vmem [thread:$0]  %s279, 256, %s281, [#allocation6], 64, 64, 4
        $region24: #{tpu_custom_call.1} parent=11 // pred_fallthru
          _
        // Predicated region
        $region25: #{tpu_custom_call.1} parent=11 // pred_check
          %p287 = pneg %p174
        $region26: #{tpu_custom_call.1} parent=11 // pred_check_branch
          %289 = sbr.rel (%p287) target = $region28
        $region27: #{tpu_custom_call.1} parent=11 // pred_region
          %p290 = scmp.lt.s32.totalorder %s35, 0
          %s291 = scalar_select %p290, %s35, 0
          %s292 = scalar_lea.vmem %s4, %s291
        $region28: #{tpu_custom_call.1} parent=11 // pred_fallthru
          _
      $region12: #{tpu_custom_call.1} parent=5 // pred_fallthru
        _
      %p293 = scmp.lt.s32.totalorder %s23, 2
      // Predicated region
      $region29: #{tpu_custom_call.1} parent=5 // pred_check
        %p294 = pneg %p293
      $region30: #{tpu_custom_call.1} parent=5 // pred_check_branch
        %296 = sbr.rel (%p294) target = $region32
      $region31: #{tpu_custom_call.1} parent=5 // pred_region
        // Predicated region
        $region33: #{tpu_custom_call.1} parent=31 // pred_check
          %p297 = pneg %p64
        $region34: #{tpu_custom_call.1} parent=31 // pred_check_branch
          %299 = sbr.rel (%p297) target = $region36
        $region35: #{tpu_custom_call.1} parent=31 // pred_region
          %s300 = sand.u32 %s54, 1
          %s301 = scalar_lea.sflag [#allocation3], %s300
          %s302 = sand.u32 %s54, 1
          %s303 = smul.addr %s302, 4
          %s304 = scalar_lea.vmem [#allocation2], %s303
          %s306 = ssub.s32 64, 64
          %307 = vsyncadd %s301, %s306
          %s308 = sadd.s32 %s31, %s30
          %s309 = smul.addr %s308, 64
          %s310 = scalar_lea.hbm %s0, %s309
          %s312 = sshll.u32 %s304, 4
          %s313 = int_to_ptr.vmem [resolvable:$true] %s312
          %315 = dma.hbm_to_vmem [thread:$0]  %s310, 64, %s313, %s301
        $region36: #{tpu_custom_call.1} parent=31 // pred_fallthru
          _
      $region32: #{tpu_custom_call.1} parent=5 // pred_fallthru
        _
      %p316 = scmp.le.s32.totalorder 1, %s23
      %p317 = scmp.lt.s32.totalorder %s23, 3
      %p318 = pnand %p316, %p317
      %p319 = pneg %p318
      // Predicated region
      $region37: #{tpu_custom_call.1} parent=5 // pred_check
        _
      $region38: #{tpu_custom_call.1} parent=5 // pred_check_branch
        %321 = sbr.rel (%p318) target = $region40
      $region39: #{tpu_custom_call.1} parent=5 // pred_region
        %s322 = ssub.s32 %s23, 1
        %s323 = sand.u32 %s57, 1
        %s324 = scalar_lea.sflag [#allocation3], %s323
        %s325 = sand.u32 %s57, 1
        %s326 = smul.addr %s325, 4
        %s327 = scalar_lea.vmem [#allocation2], %s326
        // Predicated region
        $region41: #{tpu_custom_call.1} parent=39 // pred_check
          %p328 = pneg %p70
        $region42: #{tpu_custom_call.1} parent=39 // pred_check_branch
          %330 = sbr.rel (%p328) target = $region44
        $region43: #{tpu_custom_call.1} parent=39 // pred_region
          %331 = dma.done %s324, 64
        $region44: #{tpu_custom_call.1} parent=39 // pred_fallthru
          _
        // Predicated region
        $region45: #{tpu_custom_call.1} parent=39 // pred_check
          %p332 = pneg %p96
        $region46: #{tpu_custom_call.1} parent=39 // pred_check_branch
          %334 = sbr.rel (%p332) target = $region48
        $region47: #{tpu_custom_call.1} parent=39 // pred_region
          %335 = dma.done [#allocation6], 256
        $region48: #{tpu_custom_call.1} parent=39 // pred_fallthru
          _
        // Predicated region
        $region49: #{tpu_custom_call.1} parent=39 // pred_check
          %p336 = pneg %p148
        $region50: #{tpu_custom_call.1} parent=39 // pred_check_branch
          %338 = sbr.rel (%p336) target = $region52
        $region51: #{tpu_custom_call.1} parent=39 // pred_region
          %339 = dma.done [#allocation6], 256
        $region52: #{tpu_custom_call.1} parent=39 // pred_fallthru
          _
        %s340 = sand.u32 %s57, 1
        %s341 = scalar_lea.sflag [#allocation3], %s340
        %s342 = sand.u32 %s57, 1
        %s343 = smul.addr %s342, 4
        %s344 = scalar_lea.vmem [#allocation2], %s343
        %p345 = pneg %p70
        %p346 = pneg %p67
        %p347 = pneg %p96
        %p348 = pneg %p93
        %p349 = scmp.lt.s32.totalorder %s35, 0
        %s350 = scalar_select %p349, %s35, 0
        %s351 = scalar_lea.vmem %s2, %s350
        %p352 = pneg %p122
        %p353 = pneg %p119
        %p354 = pneg %p148
        %p355 = pneg %p145
        %p356 = scmp.lt.s32.totalorder %s35, 0
        %s357 = scalar_select %p356, %s35, 0
        %s358 = scalar_lea.vmem %s4, %s357
        %p359 = pneg %p174
        %p360 = pneg %p171
        %p361 = pneg %p204
        %p362 = pneg %p201
        %s363 = sand.u32 %s191, 1
        %s364 = scalar_lea.sflag [#allocation4], %s363
        %s365 = sand.u32 %s191, 1
        %s366 = smul.addr %s365, 4
        %s367 = scalar_lea.vmem [#allocation8], %s366
        %p368 = pneg %p234
        %p369 = pneg %p231
        %s370 = sand.u32 %s221, 1
        %s371 = scalar_lea.sflag [#allocation10], %s370
        %s372 = sand.u32 %s221, 1
        %s373 = smul.addr %s372, 4
        %s374 = scalar_lea.vmem [#allocation9], %s373
        %p375 = scmp.lt.s32.totalorder %s35, 0
        %s376 = scalar_select %p375, %s35, 0
        %s377 = scalar_lea.vmem %s2, %s376
        %p378 = scmp.lt.s32.totalorder %s35, 0
        %s379 = scalar_select %p378, %s35, 0
        %s380 = scalar_lea.vmem %s4, %s379
        %v382 = vld [vmem:[%s327] sm:$0xf]
        %v383 = vld [vmem:[#allocation5] sm:$0xf]
        %v384 = vld [vmem:[#allocation5 + $0x4] sm:$0xf]
        %v385 = vld [vmem:[#allocation5 + $0x8] sm:$0xf]
        %v386 = vld [vmem:[#allocation5 + $0xc] sm:$0xf]
        %v387 = vld [vmem:[%s377] sm:$0x1]
        %v389 = vlaneseq
        %v390 = vshrl.u32 %v389, 7
        %v391 = vsub.s32 0, %v390
        %v392 = vrot.slane %v387, %v391
        %v398 = vunpack.c.l.b16 %v383
        %v399 = vunpack.c.l.b16 %v384
        %v400 = vunpack.c.l.b16 %v385
        %v401 = vunpack.c.l.b16 %v386
        %v402 = vpack.c.b16 %v399, %v398
        %v403 = vpack.c.b16 %v401, %v400
        %vm406 = vcmask 261120
        %v408 = vsel %vm406, %v382, 0
        %410 = vmatprep.subr.bf16.mxu0 0
        %411 = vmatpush1.bf16.msra.mxu0 0
        %412 = vmatprep.subr.bf16.mxu0 0
        %413 = vmatpush1.bf16.msra.mxu0 0
        %414 = vmatprep.subr.bf16.mxu0 0
        %415 = vmatpush1.bf16.msra.mxu0 0
        %416 = vmatprep.subr.bf16.mxu0 0
        %417 = vmatpush1.bf16.msra.mxu0 0
        %418 = vmatprep.subr.bf16.mxu0 0
        %419 = vmatpush1.bf16.msra.mxu0 0
        %420 = vmatprep.subr.bf16.mxu0 0
        %421 = vmatpush1.bf16.msra.mxu0 0
        %422 = vmatprep.subr.bf16.mxu0 0
        %423 = vmatpush1.bf16.msra.mxu0 %v403
        %424 = vmatprep.subr.bf16.mxu0 0
        %425 = vmatpush1.bf16.msra.mxu0 %v402
        %426 = vmatprep.subr.bf16.mxu0 0
        %427 = vmatpush2.bf16.msra.mxu0 0
        %428 = vmatprep.subr.bf16.mxu0 0
        %429 = vmatpush2.bf16.msra.mxu0 0
        %430 = vmatprep.subr.bf16.mxu0 0
        %431 = vmatpush2.bf16.msra.mxu0 0
        %432 = vmatprep.subr.bf16.mxu0 0
        %433 = vmatpush2.bf16.msra.mxu0 0
        %434 = vmatprep.subr.bf16.mxu0 0
        %435 = vmatpush2.bf16.msra.mxu0 0
        %436 = vmatprep.subr.bf16.mxu0 0
        %437 = vmatpush2.bf16.msra.mxu0 0
        %438 = vmatprep.subr.bf16.mxu0 0
        %439 = vmatpush2.bf16.msra.mxu0 0
        %440 = vmatprep.subr.bf16.mxu0 0
        %441 = vmatpush2.bf16.msra.mxu0 0
        %442 = vmatprep.mubr.bf16.mxu0 0
        %443 = vmatmul.mubr.bf16.gmra.mxu0 %v408
        %v444 = vpop.f32.mrf.mxu0
        %v445 = vadd.f32 %v392, %v444
        %v446 = vpop.f32.mrf.mxu0
        %v447 = vpop.f32.mrf.mxu0
        %v448 = vpop.f32.mrf.mxu0
        %449 = vdwg.mxu0
        %v450 = vld [vmem:[#allocation7] sm:$0xf]
        %v451 = vld [vmem:[#allocation7 + $0x4] sm:$0xf]
        %v452 = vld [vmem:[#allocation7 + $0x8] sm:$0xf]
        %v453 = vld [vmem:[#allocation7 + $0xc] sm:$0xf]
        %v454 = vld [vmem:[%s380] sm:$0x1]
        %v456 = vlaneseq
        %v457 = vshrl.u32 %v456, 7
        %v458 = vsub.s32 0, %v457
        %v459 = vrot.slane %v454, %v458
        %v465 = vunpack.c.l.b16 %v450
        %v466 = vunpack.c.l.b16 %v451
        %v467 = vunpack.c.l.b16 %v452
        %v468 = vunpack.c.l.b16 %v453
        %v469 = vpack.c.b16 %v466, %v465
        %v470 = vpack.c.b16 %v468, %v467
        %473 = vmatprep.subr.bf16.mxu0 0
        %474 = vmatpush1.bf16.msra.mxu0 0
        %475 = vmatprep.subr.bf16.mxu0 0
        %476 = vmatpush1.bf16.msra.mxu0 0
        %477 = vmatprep.subr.bf16.mxu0 0
        %478 = vmatpush1.bf16.msra.mxu0 0
        %479 = vmatprep.subr.bf16.mxu0 0
        %480 = vmatpush1.bf16.msra.mxu0 0
        %481 = vmatprep.subr.bf16.mxu0 0
        %482 = vmatpush1.bf16.msra.mxu0 0
        %483 = vmatprep.subr.bf16.mxu0 0
        %484 = vmatpush1.bf16.msra.mxu0 0
        %485 = vmatprep.subr.bf16.mxu0 0
        %486 = vmatpush1.bf16.msra.mxu0 %v470
        %487 = vmatprep.subr.bf16.mxu0 0
        %488 = vmatpush1.bf16.msra.mxu0 %v469
        %489 = vmatprep.subr.bf16.mxu0 0
        %490 = vmatpush2.bf16.msra.mxu0 0
        %491 = vmatprep.subr.bf16.mxu0 0
        %492 = vmatpush2.bf16.msra.mxu0 0
        %493 = vmatprep.subr.bf16.mxu0 0
        %494 = vmatpush2.bf16.msra.mxu0 0
        %495 = vmatprep.subr.bf16.mxu0 0
        %496 = vmatpush2.bf16.msra.mxu0 0
        %497 = vmatprep.subr.bf16.mxu0 0
        %498 = vmatpush2.bf16.msra.mxu0 0
        %499 = vmatprep.subr.bf16.mxu0 0
        %500 = vmatpush2.bf16.msra.mxu0 0
        %501 = vmatprep.subr.bf16.mxu0 0
        %502 = vmatpush2.bf16.msra.mxu0 0
        %503 = vmatprep.subr.bf16.mxu0 0
        %504 = vmatpush2.bf16.msra.mxu0 0
        %505 = vmatprep.mubr.bf16.mxu0 0
        %506 = vmatmul.mubr.bf16.gmra.mxu0 %v408
        %v507 = vpop.f32.mrf.mxu0
        %v508 = vadd.f32 %v459, %v507
        %v509 = vpop.f32.mrf.mxu0
        %v510 = vpop.f32.mrf.mxu0
        %v511 = vpop.f32.mrf.mxu0
        %512 = vdwg.mxu0
        %v513 = vpack.c.bf16 %v445, %v445
        %vm514 = vcmask 257024
        %515 = vst.msk [vmem:[%s367] sm:$0xf] %vm514, %v513
        %v516 = vpack.c.bf16 %v508, %v508
        %vm517 = vcmask 519168
        %518 = vst.msk [vmem:[%s374] sm:$0xf] %vm517, %v516
        %s519 = sand.u32 %s191, 1
        %s520 = scalar_lea.sflag [#allocation4], %s519
        %s521 = sand.u32 %s191, 1
        %s522 = smul.addr %s521, 4
        %s523 = scalar_lea.vmem [#allocation8], %s522
        %s524 = sand.u32 %s221, 1
        %s525 = scalar_lea.sflag [#allocation10], %s524
        %s526 = sand.u32 %s221, 1
        %s527 = smul.addr %s526, 4
        %s528 = scalar_lea.vmem [#allocation9], %s527
        // Predicated region
        $region53: #{tpu_custom_call.1} parent=39 // pred_check
          %p529 = pneg %p201
        $region54: #{tpu_custom_call.1} parent=39 // pred_check_branch
          %531 = sbr.rel (%p529) target = $region56
        $region55: #{tpu_custom_call.1} parent=39 // pred_region
          %s533 = ssub.s32 64, 64
          %534 = vsyncadd %s520, %s533
          %s535 = sadd.s32 %s35, %s34
          %s536 = sadd.s32 %s535, %s33
          %s537 = smul.addr %s536, 64
          %s538 = scalar_lea.hbm %s5, %s537
          %s540 = sshll.u32 %s523, 4
          %s541 = int_to_ptr.vmem [resolvable:$true] %s540
          %543 = dma.vmem_to_hbm [thread:$0]  %s541, 64, %s538, %s520
        $region56: #{tpu_custom_call.1} parent=39 // pred_fallthru
          _
        // Predicated region
        $region57: #{tpu_custom_call.1} parent=39 // pred_check
          %p544 = pneg %p231
        $region58: #{tpu_custom_call.1} parent=39 // pred_check_branch
          %546 = sbr.rel (%p544) target = $region60
        $region59: #{tpu_custom_call.1} parent=39 // pred_region
          %s548 = ssub.s32 64, 64
          %549 = vsyncadd %s525, %s548
          %s550 = sadd.s32 %s35, %s34
          %s551 = sadd.s32 %s550, %s33
          %s552 = smul.addr %s551, 64
          %s553 = scalar_lea.hbm %s6, %s552
          %s555 = sshll.u32 %s528, 4
          %s556 = int_to_ptr.vmem [resolvable:$true] %s555
          %558 = dma.vmem_to_hbm [thread:$0]  %s556, 64, %s553, %s525
        $region60: #{tpu_custom_call.1} parent=39 // pred_fallthru
          _
      $region40: #{tpu_custom_call.1} parent=5 // pred_fallthru
        _
      %p559 = scmp.le.s32.totalorder 2, %s23
      // Predicated region
      $region61: #{tpu_custom_call.1} parent=5 // pred_check
        %p560 = pneg %p559
      $region62: #{tpu_custom_call.1} parent=5 // pred_check_branch
        %562 = sbr.rel (%p560) target = $region64
      $region63: #{tpu_custom_call.1} parent=5 // pred_region
        %s563 = ssub.s32 %s23, 2
        // Predicated region
        $region65: #{tpu_custom_call.1} parent=63 // pred_check
          %p564 = pneg %p207
        $region66: #{tpu_custom_call.1} parent=63 // pred_check_branch
          %566 = sbr.rel (%p564) target = $region68
        $region67: #{tpu_custom_call.1} parent=63 // pred_region
          %s567 = sand.u32 %s192, 1
          %s568 = scalar_lea.sflag [#allocation4], %s567
          %s569 = sand.u32 %s192, 1
          %s570 = smul.addr %s569, 4
          %s571 = scalar_lea.vmem [#allocation8], %s570
          %572 = dma.done %s568, 64
        $region68: #{tpu_custom_call.1} parent=63 // pred_fallthru
          _
        // Predicated region
        $region69: #{tpu_custom_call.1} parent=63 // pred_check
          %p573 = pneg %p237
        $region70: #{tpu_custom_call.1} parent=63 // pred_check_branch
          %575 = sbr.rel (%p573) target = $region72
        $region71: #{tpu_custom_call.1} parent=63 // pred_region
          %s576 = sand.u32 %s222, 1
          %s577 = scalar_lea.sflag [#allocation10], %s576
          %s578 = sand.u32 %s222, 1
          %s579 = smul.addr %s578, 4
          %s580 = scalar_lea.vmem [#allocation9], %s579
          %581 = dma.done %s577, 64
        $region72: #{tpu_custom_call.1} parent=63 // pred_fallthru
          _
      $region64: #{tpu_custom_call.1} parent=5 // pred_fallthru
        _
    $region6: #{tpu_custom_call.1} parent=1 // loop_footer
      %s27 = sadd.s32 1, %s23
    $region7: #{tpu_custom_call.1} parent=1 // loop_footer_branch
      %22 = sbr.rel target = $region3
    $region8: #{tpu_custom_call.1} parent=1 // loop_exit
      _
    %582 = vsyncpa [#allocation3], 1
    %s583 = scalar_lea.sflag [#allocation3], 1
    %584 = vsyncpa %s583, 1
    %585 = vsyncpa [#allocation6], 1
    %586 = vsyncpa [#allocation4], 1
    %s587 = scalar_lea.sflag [#allocation4], 1
    %588 = vsyncpa %s587, 1
    %589 = vsyncpa [#allocation10], 1
    %s590 = scalar_lea.sflag [#allocation10], 1
    %591 = vsyncpa %s590, 1

</llo_original>
